<compile_context>
chip_gen: v6e
topology: v6e:2x2x1
jax: 0.10.0
libtpu: 0.0.40
codegen_flags: <defaults>
</compile_context>

<pallas_src>
import functools

import jax
import jax.numpy as jnp
import numpy as np
from jax.experimental import pallas as pl
from jax.experimental.pallas import tpu as pltpu


def _stats_kernel(x_ref, shift_ref, s1_ref, s2_ref):
    """Accumulate shifted per-row sum / sum-of-squares over the hw grid axis.

    x_ref: (TR, THW), shift_ref: (TR, 1), s1_ref/s2_ref: (TR, 1) resident
    output accumulators (same block index for every hw step).
    """
    @pl.when(pl.program_id(1) == 0)
    def _init():
        s1_ref[...] = jnp.zeros_like(s1_ref)
        s2_ref[...] = jnp.zeros_like(s2_ref)

    d = x_ref[...].astype(jnp.float32) - shift_ref[...]        # broadcast over lanes
    s1_ref[...] += jnp.sum(d, axis=1, keepdims=True)
    s2_ref[...] += jnp.sum(d * d, axis=1, keepdims=True)


def _normalize_kernel(x_ref, scale_ref, bias_ref, y_ref, *, unnorm):
    """Pure-VALU normalize: per-row scale/bias precomputed, no divide/sqrt."""
    x = x_ref[...].astype(jnp.float32)
    scale = scale_ref[...]
    bias = bias_ref[...]
    if unnorm:
        y = jnp.clip(x, -5.0, 5.0) * scale + bias
    else:
        y = jnp.clip((x - bias) * scale, -5.0, 5.0)
    y_ref[...] = y.astype(y_ref.dtype)


def _pick_tile(dim, unit, cap):
    """Largest multiple of `unit` that divides `dim`, capped; fallback: full dim."""
    best = 0
    t = unit
    limit = min(dim, cap)
    while t <= limit:
        if dim % t == 0:
            best = t
        t += unit
    return best if best > 0 else dim


def moving_mean_std_forward(x_nchw, moving_mean, moving_var, *,
                            momentum=0.9998, epsilon=1e-5,
                            training=True, unnorm=False,
                            max_row_tile=512, max_lane_tile=2048):
    """Returns (y_nchw, new_moving_mean, new_moving_var)."""
    n, c, h, w = x_nchw.shape
    hw = h * w
    r = n * c
    m = n * hw
    itemsize = jnp.dtype(x_nchw.dtype).itemsize

    # Free (contiguous, layout-preserving) reshape: NCHW -> (N*C, H*W). No transpose.
    x2d = x_nchw.reshape(r, hw)
    mm = moving_mean.astype(jnp.float32).reshape(c)
    mv = moving_var.astype(jnp.float32).reshape(c)

    # Tile selection: lane tile multiple of 128, row tile multiple of 8,
    # per-block footprint capped at ~2 MiB (double-buffered in+out tiles stay
    # well under even v5e's 16 MiB default scoped-VMEM limit; v7x-safe).
    t_hw = _pick_tile(hw, 128, max_lane_tile)
    row_cap = max(8, min(max_row_tile, ((2 * 1024 * 1024 // 4) // max(t_hw, 1)) // 8 * 8))
    t_r = _pick_tile(r, 8, row_cap)
    grid = (r // t_r, hw // t_hw)

    vmem_limit = 32 * 1024 * 1024  # explicit, safe on v5e/v6e/v7x
    cparams_reduce = pltpu.CompilerParams(
        dimension_semantics=("parallel", "arbitrary"),
        vmem_limit_bytes=vmem_limit)
    cparams_map = pltpu.CompilerParams(
        dimension_semantics=("parallel", "parallel"),
        vmem_limit_bytes=vmem_limit)

    if training:
        # Shift = current moving_mean (per channel, replicated per row) keeps the
        # one-pass sum/sumsq variance free of catastrophic cancellation.
        shift_rows = jnp.broadcast_to(mm[None, :], (n, c)).reshape(r, 1)

        s1_rows, s2_rows = pl.pallas_call(
            _stats_kernel,
            out_shape=(jax.ShapeDtypeStruct((r, 1), jnp.float32),
                       jax.ShapeDtypeStruct((r, 1), jnp.float32)),
            grid=grid,
            in_specs=[pl.BlockSpec((t_r, t_hw), lambda i, j: (i, j)),
                      pl.BlockSpec((t_r, 1), lambda i, j: (i, 0))],
            out_specs=(pl.BlockSpec((t_r, 1), lambda i, j: (i, 0)),
                       pl.BlockSpec((t_r, 1), lambda i, j: (i, 0))),
            compiler_params=cparams_reduce,
            cost_estimate=pl.CostEstimate(
                flops=4 * r * hw, transcendentals=0,
                bytes_accessed=int(r * hw * itemsize + 3 * r * 4)),
        )(x2d, shift_rows)

        # Tiny (C,)-sized finalize math.
        s1 = s1_rows.reshape(n, c).sum(axis=0)
        s2 = s2_rows.reshape(n, c).sum(axis=0)
        mean = mm + s1 / m
        var = (s2 - s1 * s1 / m) / (m - 1)          # unbiased, like torch.var default
        mm_new = mm * momentum + mean * (1.0 - momentum)
        mv_new = mv * momentum + var * (1.0 - momentum)
    else:
        mm_new, mv_new = mm, mv

    # Per-channel scale/bias (computed once, C elements), expanded per row.
    std = jnp.sqrt(mv_new + epsilon)
    if unnorm:
        scale_c, bias_c = std, mm_new                # y = clip(x)*std + mean
    else:
        scale_c, bias_c = 1.0 / std, mm_new          # y = clip((x-mean)*inv_std)
    scale_rows = jnp.broadcast_to(scale_c[None, :], (n, c)).reshape(r, 1)
    bias_rows = jnp.broadcast_to(bias_c[None, :], (n, c)).reshape(r, 1)

    y2d = pl.pallas_call(
        functools.partial(_normalize_kernel, unnorm=bool(unnorm)),
        out_shape=jax.ShapeDtypeStruct((r, hw), x_nchw.dtype),
        grid=grid,
        in_specs=[pl.BlockSpec((t_r, t_hw), lambda i, j: (i, j)),
                  pl.BlockSpec((t_r, 1), lambda i, j: (i, 0)),
                  pl.BlockSpec((t_r, 1), lambda i, j: (i, 0))],
        out_specs=pl.BlockSpec((t_r, t_hw), lambda i, j: (i, j)),
        compiler_params=cparams_map,
        cost_estimate=pl.CostEstimate(
            flops=3 * r * hw, transcendentals=0,
            bytes_accessed=int(2 * r * hw * itemsize + 2 * r * 4)),
    )(x2d, scale_rows, bias_rows)

    y = y2d.reshape(n, c, h, w)                      # free reshape back to NCHW
    return y, mm_new, mv_new


def _reference_numpy(x, mm, mv, momentum, eps, unnorm=False):
    x64 = np.asarray(x, dtype=np.float64)
    mm = np.asarray(mm, dtype=np.float64)
    mv = np.asarray(mv, dtype=np.float64)
    mean = x64.mean(axis=(0, 2, 3))
    var = x64.var(axis=(0, 2, 3), ddof=1)            # unbiased, like torch.var
    mm = mm * momentum + mean * (1.0 - momentum)
    mv = mv * momentum + var * (1.0 - momentum)
    mm_b = mm[None, :, None, None]
    mv_b = mv[None, :, None, None]
    if unnorm:
        y = np.clip(x64, -5.0, 5.0)
        y = np.sqrt(mv_b + eps) * y + mm_b
    else:
        y = (x64 - mm_b) / np.sqrt(mv_b + eps)
        y = np.clip(y, -5.0, 5.0)
    return y.astype(np.float32), mm.astype(np.float32), mv.astype(np.float32)


if __name__ == "__main__":
    momentum, eps = 0.9998, 1e-5

    # --- test 1: small canonical shape, norm + unnorm paths -----------------
    key = jax.random.PRNGKey(0)
    N, C, H, W = 2, 4, 16, 16
    x = jax.random.normal(key, (N, C, H, W), dtype=jnp.float32) * 2.0 + 0.5
    mm0 = jnp.zeros((C,), jnp.float32)
    mv0 = jnp.ones((C,), jnp.float32)

    y, mm_new, mv_new = moving_mean_std_forward(
        x, mm0, mv0, momentum=momentum, epsilon=eps, training=True, unnorm=False)
    jax.block_until_ready((y, mm_new, mv_new))

    y_ref, mm_ref, mv_ref = _reference_numpy(
        x, np.zeros((C,)), np.ones((C,)), momentum, eps, unnorm=False)
    np.testing.assert_allclose(np.asarray(y), y_ref, rtol=1e-4, atol=1e-4)
    np.testing.assert_allclose(np.asarray(mm_new), mm_ref, rtol=1e-5, atol=1e-5)
    np.testing.assert_allclose(np.asarray(mv_new), mv_ref, rtol=1e-5, atol=1e-5)

    yu, _, _ = moving_mean_std_forward(
        x, mm0, mv0, momentum=momentum, epsilon=eps, training=True, unnorm=True)
    jax.block_until_ready(yu)
    yu_ref, _, _ = _reference_numpy(
        x, np.zeros((C,)), np.ones((C,)), momentum, eps, unnorm=True)
    np.testing.assert_allclose(np.asarray(yu), yu_ref, rtol=1e-4, atol=1e-4)

    # --- test 2: larger shape + small tile caps to exercise the multi-step
    #             grid (row-parallel axis, hw reduction accumulation) --------
    key2 = jax.random.PRNGKey(1)
    N2, C2, H2, W2 = 4, 4, 32, 32
    x2 = jax.random.normal(key2, (N2, C2, H2, W2), dtype=jnp.float32) * 1.5 - 0.3
    y2, mm2, mv2 = moving_mean_std_forward(
        x2, jnp.zeros((C2,), jnp.float32), jnp.ones((C2,), jnp.float32),
        momentum=momentum, epsilon=eps, training=True, unnorm=False,
        max_row_tile=8, max_lane_tile=256)           # grid = (2, 4)
    jax.block_until_ready((y2, mm2, mv2))

    y2_ref, mm2_ref, mv2_ref = _reference_numpy(
        x2, np.zeros((C2,)), np.ones((C2,)), momentum, eps, unnorm=False)
    np.testing.assert_allclose(np.asarray(y2), y2_ref, rtol=1e-4, atol=1e-4)
    np.testing.assert_allclose(np.asarray(mm2), mm2_ref, rtol=1e-5, atol=1e-5)
    np.testing.assert_allclose(np.asarray(mv2), mv2_ref, rtol=1e-5, atol=1e-5)

    print("KERNEL_OK")
</pallas_src>

<mosaic_0001>
module attributes {stable_mosaic.version = 11 : i64} {
  func.func @_stats_kernel(%arg0: i32, %arg1: i32, %arg2: memref<8x256xf32, #tpu.memory_space<vmem>>, %arg3: memref<8x1xf32, #tpu.memory_space<vmem>>, %arg4: memref<8x1xf32, #tpu.memory_space<vmem>>, %arg5: memref<8x1xf32, #tpu.memory_space<vmem>>) attributes {dimension_semantics = [#tpu.dimension_semantics<parallel>, #tpu.dimension_semantics<arbitrary>], iteration_bounds = array<i64: 1, 1>, scalar_prefetch = 0 : i64, scratch_operands = 0 : i64, tpu.core_type = #tpu.core_type<tc>, window_params = [{transform_indices = @transform_0, window_bounds = array<i64: 8, 256>}, {transform_indices = @transform_1, window_bounds = array<i64: 8, 1>}, {transform_indices = @transform_2, window_bounds = array<i64: 8, 1>}, {transform_indices = @transform_3, window_bounds = array<i64: 8, 1>}]} {
    %c0_i32 = arith.constant 0 : i32
    %0 = arith.cmpi eq, %arg1, %c0_i32 : i32
    %1 = arith.extui %0 : i1 to i32
    %c0_i32_0 = arith.constant 0 : i32
    %2 = arith.cmpi ne, %1, %c0_i32_0 : i32
    scf.if %2 {
      %cst_13 = arith.constant 0.000000e+00 : f32
      %18 = vector.broadcast %cst_13 : f32 to vector<8x1xf32>
      %c0_14 = arith.constant 0 : index
      %c0_15 = arith.constant 0 : index
      %19 = vector.load %arg4[%c0_14, %c0_15] : memref<8x1xf32, #tpu.memory_space<vmem>>, vector<8x1xf32>
      tpu.vector_store %arg4[%c0_14, %c0_15], %18 {strides = array<i32>} : memref<8x1xf32, #tpu.memory_space<vmem>>, vector<8x1xf32>,
      %cst_16 = arith.constant 0.000000e+00 : f32
      %20 = vector.broadcast %cst_16 : f32 to vector<8x1xf32>
      %c0_17 = arith.constant 0 : index
      %c0_18 = arith.constant 0 : index
      %21 = vector.load %arg5[%c0_17, %c0_18] : memref<8x1xf32, #tpu.memory_space<vmem>>, vector<8x1xf32>
      tpu.vector_store %arg5[%c0_17, %c0_18], %20 {strides = array<i32>} : memref<8x1xf32, #tpu.memory_space<vmem>>, vector<8x1xf32>,
    } else {
    }
    %c0 = arith.constant 0 : index
    %c0_1 = arith.constant 0 : index
    %3 = vector.load %arg2[%c0, %c0_1] : memref<8x256xf32, #tpu.memory_space<vmem>>, vector<8x256xf32>
    %c0_2 = arith.constant 0 : index
    %c0_3 = arith.constant 0 : index
    %4 = vector.load %arg3[%c0_2, %c0_3] : memref<8x1xf32, #tpu.memory_space<vmem>>, vector<8x1xf32>
    %5 = vector.broadcast %4 : vector<8x1xf32> to vector<8x256xf32>
    %6 = arith.subf %3, %5 : vector<8x256xf32>
    %c0_4 = arith.constant 0 : index
    %c0_5 = arith.constant 0 : index
    %7 = vector.load %arg4[%c0_4, %c0_5] : memref<8x1xf32, #tpu.memory_space<vmem>>, vector<8x1xf32>
    %cst = arith.constant dense<0.000000e+00> : vector<8xf32>
    %8 = vector.multi_reduction <add>, %6, %cst [1] : vector<8x256xf32> to vector<8xf32>
    %9 = vector.shape_cast %8 : vector<8xf32> to vector<8x1xf32>
    %10 = arith.addf %7, %9 : vector<8x1xf32>
    %c0_6 = arith.constant 0 : index
    %c0_7 = arith.constant 0 : index
    %11 = vector.load %arg4[%c0_6, %c0_7] : memref<8x1xf32, #tpu.memory_space<vmem>>, vector<8x1xf32>
    tpu.vector_store %arg4[%c0_6, %c0_7], %10 {strides = array<i32>} : memref<8x1xf32, #tpu.memory_space<vmem>>, vector<8x1xf32>,
    %c0_8 = arith.constant 0 : index
    %c0_9 = arith.constant 0 : index
    %12 = vector.load %arg5[%c0_8, %c0_9] : memref<8x1xf32, #tpu.memory_space<vmem>>, vector<8x1xf32>
    %13 = arith.mulf %6, %6 : vector<8x256xf32>
    %cst_10 = arith.constant dense<0.000000e+00> : vector<8xf32>
    %14 = vector.multi_reduction <add>, %13, %cst_10 [1] : vector<8x256xf32> to vector<8xf32>
    %15 = vector.shape_cast %14 : vector<8xf32> to vector<8x1xf32>
    %16 = arith.addf %12, %15 : vector<8x1xf32>
    %c0_11 = arith.constant 0 : index
    %c0_12 = arith.constant 0 : index
    %17 = vector.load %arg5[%c0_11, %c0_12] : memref<8x1xf32, #tpu.memory_space<vmem>>, vector<8x1xf32>
    tpu.vector_store %arg5[%c0_11, %c0_12], %16 {strides = array<i32>} : memref<8x1xf32, #tpu.memory_space<vmem>>, vector<8x1xf32>,
    return
  }
  func.func @transform_0(%arg0: i32, %arg1: i32) -> (i32, i32) {
    %c0_i32 = arith.constant 0 : i32
    return %arg0, %arg1 : i32, i32
  }
  func.func @transform_1(%arg0: i32, %arg1: i32) -> (i32, i32) {
    %c0_i32 = arith.constant 0 : i32
    %c0_i32_0 = arith.constant 0 : i32
    return %arg0, %c0_i32 : i32, i32
  }
  func.func @transform_2(%arg0: i32, %arg1: i32) -> (i32, i32) {
    %c0_i32 = arith.constant 0 : i32
    %c0_i32_0 = arith.constant 0 : i32
    return %arg0, %c0_i32 : i32, i32
  }
  func.func @transform_3(%arg0: i32, %arg1: i32) -> (i32, i32) {
    %c0_i32 = arith.constant 0 : i32
    %c0_i32_0 = arith.constant 0 : i32
    return %arg0, %c0_i32 : i32, i32
  }
}

</mosaic_0001>

<llo_original>
// kernel: tpu_custom_call.1
$region0: #{tpu_custom_call.1}
  #allocation0 [shape = 'u32[]', space=smem, size = 0x4, offset = 0x4, fixed_abs, tag = 'smem constant byte address 0x4 - core index']
  #allocation1 [shape = 'u32[144,128]{1,0:T(1,128)}', space=vmem, size = 0x12000, scoped, tag = 'internal scratch']
  %s0 = inlined_call_operand.hbm [shape: f32[8,256], index: 0, kind: input, shape index: {}]
  %s1 = inlined_call_operand.vmem [shape: f32[8,1], index: 1, kind: input, shape index: {}]
  %s2 = inlined_call_operand.vmem [shape: f32[8,1], index: 2, kind: output, shape index: {0}]
  %s3 = inlined_call_operand.vmem [shape: f32[8,1], index: 3, kind: output, shape index: {1}]
  %4 = xla_tuple %s2, %s3
  %s5 = sld [smem:[#allocation0]]
  $region34: #{tpu_custom_call.1} parent=0
    _
  %s7 = ssub.s32 1, %s5
  %s8 = scalar_select 0, %s7, %s5
  $region1: #{tpu_custom_call.1} parent=0
    #allocation2 [shape = 'u8[8192]{0}', space=vmem, size = 0x2000, scoped, tag = 'input window, operand 0, single buffered']
    #allocation3 [shape = 's32[1]{0}', space=sflag, size = 0x4, scoped, tag = 'scoped memory for tpu_custom_call.1']
    %9 = vsyncpa [#allocation3], 0
    // Predicated region
    $region2: #{tpu_custom_call.1} parent=1 // pred_check
      _
    $region3: #{tpu_custom_call.1} parent=1 // pred_check_branch
      %11 = sbr.rel (0) target = $region5
    $region4: #{tpu_custom_call.1} parent=1 // pred_region
      %s13 = ssub.s32 256, 256
      %14 = vsyncadd [#allocation3], %s13
      %s16 = sshll.u32 [#allocation2], 4
      %s17 = int_to_ptr.vmem [resolvable:$true] %s16
      %19 = dma.hbm_to_vmem [thread:$0]  %s0, 256, %s17, [#allocation3]
    $region5: #{tpu_custom_call.1} parent=1 // pred_fallthru
      _
    // Predicated region
    $region6: #{tpu_custom_call.1} parent=1 // pred_check
      _
    $region7: #{tpu_custom_call.1} parent=1 // pred_check_branch
      %21 = sbr.rel (0) target = $region9
    $region8: #{tpu_custom_call.1} parent=1 // pred_region
      _
    $region9: #{tpu_custom_call.1} parent=1 // pred_fallthru
      _
    // Predicated region
    $region10: #{tpu_custom_call.1} parent=1 // pred_check
      _
    $region11: #{tpu_custom_call.1} parent=1 // pred_check_branch
      %23 = sbr.rel (0) target = $region13
    $region12: #{tpu_custom_call.1} parent=1 // pred_region
      %24 = dma.done [#allocation3], 256
    $region13: #{tpu_custom_call.1} parent=1 // pred_fallthru
      _
    %p25 = scmp.eq.s32.totalorder 0, 0
    // Predicated region
    $region14: #{tpu_custom_call.1} parent=1 // pred_check
      %p26 = pneg %p25
    $region15: #{tpu_custom_call.1} parent=1 // pred_check_branch
      %28 = sbr.rel (%p26) target = $region17
    $region16: #{tpu_custom_call.1} parent=1 // pred_region
      %vm29 = vcmask 7168
      %30 = vst.msk [vmem:[%s2] sm:$0xff] %vm29, 0.0
      %31 = vst.msk [vmem:[%s3] sm:$0xff] %vm29, 0.0
    $region17: #{tpu_custom_call.1} parent=1 // pred_fallthru
      _
    %v32 = vld [vmem:[#allocation2] sm:$0xff]
    %v33 = vld [vmem:[#allocation2 + $0x8] sm:$0xff]
    %v34 = vld [vmem:[%s1] sm:$0xff]
    %36 = vset.pattern.permute.xlu0 0
    %37 = vperm.xlu0 %36, %v34
    %v38 = vpop.permute.xlu0 %37
    %v40 = vsub.f32 %v32, %v38
    %v41 = vsub.f32 %v33, %v38
    %v42 = vld [vmem:[%s2] sm:$0xff]
    %v43 = vadd.f32 %v40, %v41
    %44 = vadd.xlane.f32.xlu0 %v43
    %v45 = vpop.xlane.xlu0 %44
    %v46 = vadd.f32 %v42, %v45
    %vm47 = vcmask 7168
    %48 = vst.msk [vmem:[%s2] sm:$0xff] %vm47, %v46
    %v49 = vld [vmem:[%s3] sm:$0xff]
    %v50 = vmul.f32 %v40, %v40
    %v51 = vmul.f32 %v41, %v41
    %v52 = vadd.f32 %v50, %v51
    %53 = vadd.xlane.f32.xlu0 %v52
    %v54 = vpop.xlane.xlu0 %53
    %v55 = vadd.f32 %v49, %v54
    %56 = vst.msk [vmem:[%s3] sm:$0xff] %vm47, %v55
    // Predicated region
    $region18: #{tpu_custom_call.1} parent=1 // pred_check
      _
    $region19: #{tpu_custom_call.1} parent=1 // pred_check_branch
      %58 = sbr.rel (0) target = $region21
    $region20: #{tpu_custom_call.1} parent=1 // pred_region
      _
    $region21: #{tpu_custom_call.1} parent=1 // pred_fallthru
      _
    // Predicated region
    $region22: #{tpu_custom_call.1} parent=1 // pred_check
      _
    $region23: #{tpu_custom_call.1} parent=1 // pred_check_branch
      %60 = sbr.rel (0) target = $region25
    $region24: #{tpu_custom_call.1} parent=1 // pred_region
      _
    $region25: #{tpu_custom_call.1} parent=1 // pred_fallthru
      _
    // Predicated region
    $region26: #{tpu_custom_call.1} parent=1 // pred_check
      _
    $region27: #{tpu_custom_call.1} parent=1 // pred_check_branch
      %62 = sbr.rel (0) target = $region29
    $region28: #{tpu_custom_call.1} parent=1 // pred_region
      _
    $region29: #{tpu_custom_call.1} parent=1 // pred_fallthru
      _
    // Predicated region
    $region30: #{tpu_custom_call.1} parent=1 // pred_check
      _
    $region31: #{tpu_custom_call.1} parent=1 // pred_check_branch
      %64 = sbr.rel (0) target = $region33
    $region32: #{tpu_custom_call.1} parent=1 // pred_region
      _
    $region33: #{tpu_custom_call.1} parent=1 // pred_fallthru
      _
    %65 = vsyncpa [#allocation3], 1

</llo_original>
